<compile_context>
chip_gen: v7x
topology: tpu7x:2x2x1
jax: 0.10.0
libtpu: 0.0.40
codegen_flags: <defaults>
</compile_context>

<pallas_src>
import functools
import math

import jax
import jax.numpy as jnp
from jax.experimental import pallas as pl
from jax.experimental.pallas import tpu as pltpu

LANE = 128
SUBLANE = 8


def _round_up(x, m):
    return ((x + m - 1) // m) * m


def _num_tensorcores():
    """Best-effort TensorCore-per-device count (2 on v7x, 1 on v5e/v6e)."""
    try:
        dev = jax.devices()[0]
        for attr in ("num_cores", "core_count", "num_tensorcores"):
            n = getattr(dev, attr, None)
            if isinstance(n, int) and n > 0:
                return n
    except Exception:
        pass
    try:
        info = pltpu.get_tpu_info()
        for attr in ("num_cores", "tensorcores_per_chip", "cores_per_chip"):
            n = getattr(info, attr, None)
            if isinstance(n, int) and n > 0:
                return n
    except Exception:
        pass
    return 1


def _beta_nll_kernel(obs_ref, mu_ref, sig_ref, out_ref, acc_ref, *,
                     beta, sigma_transform):
    i = pl.program_id(1)

    @pl.when(i == 0)
    def _():
        acc_ref[...] = jnp.zeros_like(acc_ref)

    obs = obs_ref[...].astype(jnp.float32)
    mu = mu_ref[...].astype(jnp.float32)
    sig = sig_ref[...].astype(jnp.float32)

    if sigma_transform == "softplus":
        # numerically stable softplus
        var = jnp.maximum(sig, 0.0) + jnp.log1p(jnp.exp(-jnp.abs(sig)))
        logvar = jnp.log(var)
    elif sigma_transform == "exp":
        var = jnp.exp(sig)
        logvar = sig                      # log(exp(sig)) == sig, skip the log
    elif sigma_transform == "none":
        var = sig
        logvar = jnp.log(var)
    else:
        raise NotImplementedError(f"Sigma transform {sigma_transform}")

    diff = obs - mu
    sq = diff * diff

    # EUP-minimizing forms: fold the divide into the beta weighting.
    if beta == 0.5:
        t = jax.lax.rsqrt(var)                    # var**-0.5, one EUP push
        # 0.5*(d^2/var + logvar) * var^0.5 == 0.5*(d^2*t + logvar*(var*t))
        loss = 0.5 * (sq * t + logvar * (var * t))
    elif beta > 0:
        w1 = jnp.exp((beta - 1.0) * logvar)       # var**(beta-1), reuses logvar
        loss = 0.5 * (sq * w1 + logvar * (var * w1))
    else:
        loss = 0.5 * (sq / var + logvar)

    # Shrunken vreg-shaped accumulator: tile-aligned reshape + pure-VPU adds,
    # no cross-lane/sublane reduce on the per-step path.
    acc_ref[...] += jnp.sum(loss.reshape(-1, SUBLANE, LANE), axis=0)

    @pl.when(i == pl.num_programs(1) - 1)
    def _():
        out_ref[0] = acc_ref[...]                 # lane-dense (8,128) partial sum


def beta_nll_loss(observation, mu, sigma, *, beta=0.5, reduction="mean",
                  sigma_transform="softplus", max_block_rows=8192):
    """Pallas Beta-NLL forward. reduction in {'mean', 'sum'}."""
    if reduction not in ("mean", "sum"):
        # TODO(synk): reduction='none' (per-element loss output) not implemented.
        raise NotImplementedError(f"Reduction {reduction} not implemented")
    if sigma_transform not in ("softplus", "exp", "none"):
        raise NotImplementedError(f"Sigma transform {sigma_transform}")
    assert observation.shape == mu.shape == sigma.shape
    total_n = observation.size
    assert total_n > 0

    # Row alignment: 8 for 4-byte dtypes, 16 for 2-byte (bf16) packed tiles.
    itemsize_min = min(jnp.dtype(a.dtype).itemsize
                       for a in (observation, mu, sigma))
    align = SUBLANE * max(1, 4 // max(1, itemsize_min))

    rows_needed = pl.cdiv(total_n, LANE)

    # Tile selection: biggest lane-dense tile up to max_block_rows; no divisor
    # search — awkward shapes are handled by neutral-value padding below.
    if rows_needed <= max_block_rows:
        block_rows = _round_up(max(rows_needed, 1), align)
        blocks_total = 1
    else:
        block_rows = max(align, (max_block_rows // align) * align)
        blocks_total = pl.cdiv(rows_needed, block_rows)

    # Megacore split only where there are multiple TensorCores (v7x).
    num_tc = _num_tensorcores()
    num_parts = 2 if (num_tc >= 2 and blocks_total >= 2) else 1
    if num_parts == 2 and blocks_total % 2 != 0:
        blocks_total += 1                 # one extra neutral block balances cores
    blocks_per_part = blocks_total // num_parts

    rows = blocks_total * block_rows
    padded_total = rows * LANE
    pad_n = padded_total - total_n

    obs_f = observation.reshape(-1)
    mu_f = mu.reshape(-1)
    sig_f = sigma.reshape(-1)

    if pad_n > 0:
        # Neutral padding: obs == mu and var == 1 -> per-element loss ~= 0.
        # (Exact for 'exp'/'none'; for 'softplus' the f32 inverse of 1 is
        #  accurate to ~1e-8 per padded element — negligible vs the reduce.)
        if sigma_transform == "softplus":
            sig_pad = math.log(math.e - 1.0)      # softplus^{-1}(1)
        elif sigma_transform == "exp":
            sig_pad = 0.0
        else:  # "none"
            sig_pad = 1.0
        obs_f = jnp.concatenate([obs_f, jnp.zeros((pad_n,), obs_f.dtype)])
        mu_f = jnp.concatenate([mu_f, jnp.zeros((pad_n,), mu_f.dtype)])
        sig_f = jnp.concatenate(
            [sig_f, jnp.full((pad_n,), sig_pad, sig_f.dtype)])

    obs2 = obs_f.reshape(rows, LANE)
    mu2 = mu_f.reshape(rows, LANE)
    sig2 = sig_f.reshape(rows, LANE)

    kern = functools.partial(_beta_nll_kernel, beta=beta,
                             sigma_transform=sigma_transform)

    in_spec = pl.BlockSpec(
        (block_rows, LANE),
        lambda p, i, bpp=blocks_per_part: (p * bpp + i, 0))
    out_spec = pl.BlockSpec((1, SUBLANE, LANE), lambda p, i: (p, 0, 0))

    partial_sums = pl.pallas_call(
        kern,
        out_shape=jax.ShapeDtypeStruct((num_parts, SUBLANE, LANE), jnp.float32),
        grid_spec=pltpu.PrefetchScalarGridSpec(
            num_scalar_prefetch=0,
            grid=(num_parts, blocks_per_part),
            in_specs=[in_spec, in_spec, in_spec],
            out_specs=out_spec,
            scratch_shapes=[pltpu.VMEM((SUBLANE, LANE), jnp.float32)],
        ),
        compiler_params=pltpu.CompilerParams(
            dimension_semantics=("parallel", "arbitrary"),
            vmem_limit_bytes=48 << 20),
    )(obs2, mu2, sig2)

    total = jnp.sum(partial_sums)
    if reduction == "mean":
        total = total / jnp.float32(total_n)
    return total


def _reference(observation, mu, sigma, beta=0.5, reduction="mean",
               sigma_transform="softplus"):
    s = sigma.astype(jnp.float32)
    if sigma_transform == "softplus":
        var = jax.nn.softplus(s)
    elif sigma_transform == "exp":
        var = jnp.exp(s)
    else:
        var = s
    diff = observation.astype(jnp.float32) - mu.astype(jnp.float32)
    loss = 0.5 * (diff * diff / var + jnp.log(var))
    if beta > 0:
        loss = loss * var ** beta
    return jnp.mean(loss) if reduction == "mean" else jnp.sum(loss)


if __name__ == "__main__":
    key = jax.random.PRNGKey(0)

    # Test 1: module-style NCHW input, single-block fast path.
    k1, k2, k3 = jax.random.split(key, 3)
    shape = (2, 4, 16, 16)
    observation = jax.random.normal(k1, shape, dtype=jnp.float32)
    mu = jax.random.normal(k2, shape, dtype=jnp.float32)
    sigma = jax.random.normal(k3, shape, dtype=jnp.float32)

    out = beta_nll_loss(observation, mu, sigma, beta=0.5, reduction="mean")
    out = jax.block_until_ready(out)
    ref = _reference(observation, mu, sigma, beta=0.5)
    assert jnp.allclose(out, ref, rtol=1e-5, atol=1e-5), (out, ref)

    # Test 2: force the multi-block (and, on v7x, megacore-partitioned) path.
    k4, k5, k6 = jax.random.split(jax.random.PRNGKey(1), 3)
    shape2 = (2, 4, 32, 32)
    obs2 = jax.random.normal(k4, shape2, dtype=jnp.float32)
    mu2 = jax.random.normal(k5, shape2, dtype=jnp.float32)
    sig2 = jax.random.normal(k6, shape2, dtype=jnp.float32)

    out2 = beta_nll_loss(obs2, mu2, sig2, beta=0.5, reduction="mean",
                         max_block_rows=8)
    out2 = jax.block_until_ready(out2)
    ref2 = _reference(obs2, mu2, sig2, beta=0.5)
    assert jnp.allclose(out2, ref2, rtol=1e-5, atol=1e-5), (out2, ref2)

    # Test 3: awkward element count (not a multiple of 128) -> padding path,
    # plus 'sum' reduction.
    k7, k8, k9 = jax.random.split(jax.random.PRNGKey(2), 3)
    shape3 = (3, 5, 7)
    obs3 = jax.random.normal(k7, shape3, dtype=jnp.float32)
    mu3 = jax.random.normal(k8, shape3, dtype=jnp.float32)
    sig3 = jax.random.normal(k9, shape3, dtype=jnp.float32)

    out3 = beta_nll_loss(obs3, mu3, sig3, beta=0.5, reduction="sum")
    out3 = jax.block_until_ready(out3)
    ref3 = _reference(obs3, mu3, sig3, beta=0.5, reduction="sum")
    assert jnp.allclose(out3, ref3, rtol=1e-5, atol=1e-4), (out3, ref3)

    print("KERNEL_OK")
</pallas_src>

<mosaic_0001>
module attributes {stable_mosaic.version = 11 : i64} {
  func.func @_beta_nll_kernel(%arg0: i32, %arg1: i32, %arg2: memref<16x128xf32, #tpu.memory_space<vmem>>, %arg3: memref<16x128xf32, #tpu.memory_space<vmem>>, %arg4: memref<16x128xf32, #tpu.memory_space<vmem>>, %arg5: memref<1x8x128xf32, #tpu.memory_space<vmem>>, %arg6: memref<8x128xf32, #tpu.memory_space<vmem>>) attributes {dimension_semantics = [#tpu.dimension_semantics<parallel>, #tpu.dimension_semantics<arbitrary>], iteration_bounds = array<i64: 1, 1>, scalar_prefetch = 0 : i64, scratch_operands = 1 : i64, tpu.core_type = #tpu.core_type<tc>, window_params = [{transform_indices = @transform_0, window_bounds = array<i64: 16, 128>}, {transform_indices = @transform_1, window_bounds = array<i64: 16, 128>}, {transform_indices = @transform_2, window_bounds = array<i64: 16, 128>}, {transform_indices = @transform_3, window_bounds = array<i64: 1, 8, 128>}]} {
    %c0_i32 = arith.constant 0 : i32
    %0 = arith.cmpi eq, %arg1, %c0_i32 : i32
    %1 = arith.extui %0 : i1 to i32
    %c0_i32_0 = arith.constant 0 : i32
    %2 = arith.cmpi ne, %1, %c0_i32_0 : i32
    scf.if %2 {
      %cst_15 = arith.constant 0.000000e+00 : f32
      %32 = vector.broadcast %cst_15 : f32 to vector<8x128xf32>
      %c0_16 = arith.constant 0 : index
      %c0_17 = arith.constant 0 : index
      %33 = vector.load %arg6[%c0_16, %c0_17] : memref<8x128xf32, #tpu.memory_space<vmem>>, vector<8x128xf32>
      tpu.vector_store %arg6[%c0_16, %c0_17], %32 {strides = array<i32>} : memref<8x128xf32, #tpu.memory_space<vmem>>, vector<8x128xf32>,
    } else {
    }
    %c0 = arith.constant 0 : index
    %c0_1 = arith.constant 0 : index
    %3 = vector.load %arg2[%c0, %c0_1] : memref<16x128xf32, #tpu.memory_space<vmem>>, vector<16x128xf32>
    %c0_2 = arith.constant 0 : index
    %c0_3 = arith.constant 0 : index
    %4 = vector.load %arg3[%c0_2, %c0_3] : memref<16x128xf32, #tpu.memory_space<vmem>>, vector<16x128xf32>
    %c0_4 = arith.constant 0 : index
    %c0_5 = arith.constant 0 : index
    %5 = vector.load %arg4[%c0_4, %c0_5] : memref<16x128xf32, #tpu.memory_space<vmem>>, vector<16x128xf32>
    %cst = arith.constant 0.000000e+00 : f32
    %6 = vector.broadcast %cst : f32 to vector<16x128xf32>
    %7 = arith.maximumf %5, %6 : vector<16x128xf32>
    %8 = math.absf %5 : vector<16x128xf32>
    %cst_6 = arith.constant 0.000000e+00 : f32
    %9 = vector.broadcast %cst_6 : f32 to vector<16x128xf32>
    %10 = arith.subf %9, %8 : vector<16x128xf32>
    %11 = math.exp %10 : vector<16x128xf32>
    %12 = math.log1p %11 : vector<16x128xf32>
    %13 = arith.addf %7, %12 : vector<16x128xf32>
    %14 = math.log %13 : vector<16x128xf32>
    %15 = arith.subf %3, %4 : vector<16x128xf32>
    %16 = arith.mulf %15, %15 : vector<16x128xf32>
    %17 = math.rsqrt %13 : vector<16x128xf32>
    %18 = arith.mulf %16, %17 : vector<16x128xf32>
    %19 = arith.mulf %13, %17 : vector<16x128xf32>
    %20 = arith.mulf %14, %19 : vector<16x128xf32>
    %21 = arith.addf %18, %20 : vector<16x128xf32>
    %cst_7 = arith.constant 5.000000e-01 : f32
    %22 = vector.broadcast %cst_7 : f32 to vector<16x128xf32>
    %23 = arith.mulf %22, %21 : vector<16x128xf32>
    %c0_8 = arith.constant 0 : index
    %c0_9 = arith.constant 0 : index
    %24 = vector.load %arg6[%c0_8, %c0_9] : memref<8x128xf32, #tpu.memory_space<vmem>>, vector<8x128xf32>
    %25 = vector.shape_cast %23 : vector<16x128xf32> to vector<2x8x128xf32>
    %cst_10 = arith.constant dense<0.000000e+00> : vector<8x128xf32>
    %26 = vector.multi_reduction <add>, %25, %cst_10 [0] : vector<2x8x128xf32> to vector<8x128xf32>
    %27 = arith.addf %24, %26 : vector<8x128xf32>
    %c0_11 = arith.constant 0 : index
    %c0_12 = arith.constant 0 : index
    %28 = vector.load %arg6[%c0_11, %c0_12] : memref<8x128xf32, #tpu.memory_space<vmem>>, vector<8x128xf32>
    tpu.vector_store %arg6[%c0_11, %c0_12], %27 {strides = array<i32>} : memref<8x128xf32, #tpu.memory_space<vmem>>, vector<8x128xf32>,
    %c0_i32_13 = arith.constant 0 : i32
    %29 = arith.cmpi eq, %arg1, %c0_i32_13 : i32
    %30 = arith.extui %29 : i1 to i32
    %c0_i32_14 = arith.constant 0 : i32
    %31 = arith.cmpi ne, %30, %c0_i32_14 : i32
    scf.if %31 {
      %c0_15 = arith.constant 0 : index
      %c0_16 = arith.constant 0 : index
      %32 = vector.load %arg6[%c0_15, %c0_16] : memref<8x128xf32, #tpu.memory_space<vmem>>, vector<8x128xf32>
      %c0_17 = arith.constant 0 : index
      %c0_18 = arith.constant 0 : index
      %c0_19 = arith.constant 0 : index
      %33 = vector.load %arg5[%c0_17, %c0_18, %c0_19] : memref<1x8x128xf32, #tpu.memory_space<vmem>>, vector<1x8x128xf32>
      %34 = vector.shape_cast %33 : vector<1x8x128xf32> to vector<8x128xf32>
      %35 = vector.shape_cast %32 : vector<8x128xf32> to vector<1x8x128xf32>
      tpu.vector_store %arg5[%c0_17, %c0_18, %c0_19], %35 {strides = array<i32>} : memref<1x8x128xf32, #tpu.memory_space<vmem>>, vector<1x8x128xf32>,
    } else {
    }
    return
  }
  func.func @transform_0(%arg0: i32, %arg1: i32) -> (i32, i32) {
    %c1_i32 = arith.constant 1 : i32
    %0 = arith.muli %arg0, %c1_i32 : i32
    %1 = arith.addi %0, %arg1 : i32
    %c0_i32 = arith.constant 0 : i32
    %c0_i32_0 = arith.constant 0 : i32
    return %1, %c0_i32 : i32, i32
  }
  func.func @transform_1(%arg0: i32, %arg1: i32) -> (i32, i32) {
    %c1_i32 = arith.constant 1 : i32
    %0 = arith.muli %arg0, %c1_i32 : i32
    %1 = arith.addi %0, %arg1 : i32
    %c0_i32 = arith.constant 0 : i32
    %c0_i32_0 = arith.constant 0 : i32
    return %1, %c0_i32 : i32, i32
  }
  func.func @transform_2(%arg0: i32, %arg1: i32) -> (i32, i32) {
    %c1_i32 = arith.constant 1 : i32
    %0 = arith.muli %arg0, %c1_i32 : i32
    %1 = arith.addi %0, %arg1 : i32
    %c0_i32 = arith.constant 0 : i32
    %c0_i32_0 = arith.constant 0 : i32
    return %1, %c0_i32 : i32, i32
  }
  func.func @transform_3(%arg0: i32, %arg1: i32) -> (i32, i32, i32) {
    %c0_i32 = arith.constant 0 : i32
    %c0_i32_0 = arith.constant 0 : i32
    %c0_i32_1 = arith.constant 0 : i32
    return %arg0, %c0_i32, %c0_i32_0 : i32, i32, i32
  }
}

</mosaic_0001>

<llo_original>
// kernel: tpu_custom_call.1
$region0: #{tpu_custom_call.1}
  #allocation0 [shape = 'u32[]', space=smem, size = 0x4, offset = 0x4, fixed_abs, tag = 'smem constant byte address 0x4 - core index']
  #allocation1 [shape = 'u32[144,128]{1,0:T(1,128)}', space=vmem, size = 0x12000, scoped, tag = 'internal scratch']
  #allocation2 [shape = 'f32[8,128]{1,0:T(8,128)}', space=vmem, size = 0x1000, scoped, tag = 'scratch operand']
  %s0 = inlined_call_operand.hbm [shape: f32[16,128], index: 0, kind: input, shape index: {}]
  %s1 = inlined_call_operand.hbm [shape: f32[16,128], index: 1, kind: input, shape index: {}]
  %s2 = inlined_call_operand.hbm [shape: f32[16,128], index: 2, kind: input, shape index: {}]
  %s3 = inlined_call_operand.hbm [shape: f32[1,8,128], index: 3, kind: output, shape index: {}]
  %s4 = sld [smem:[#allocation0]]
  $region42: #{tpu_custom_call.1} parent=0
    _
  %s6 = ssub.s32 1, %s4
  %s7 = scalar_select 0, %s6, %s4
  $region1: #{tpu_custom_call.1} parent=0
    #allocation3 [shape = 'u8[8192]{0}', space=vmem, size = 0x2000, scoped, tag = 'input window, operand 0, single buffered']
    #allocation4 [shape = 's32[1]{0}', space=sflag, size = 0x4, scoped, tag = 'scoped memory for tpu_custom_call.1']
    #allocation5 [shape = 's32[1]{0}', space=sflag, size = 0x4, scoped, tag = 'scoped memory for tpu_custom_call.1']
    #allocation6 [shape = 'u8[8192]{0}', space=vmem, size = 0x2000, scoped, tag = 'input window, operand 1, single buffered']
    #allocation7 [shape = 's32[1]{0}', space=sflag, size = 0x4, scoped, tag = 'scoped memory for tpu_custom_call.1']
    #allocation8 [shape = 'u8[8192]{0}', space=vmem, size = 0x2000, scoped, tag = 'input window, operand 2, single buffered']
    #allocation9 [shape = 'u8[4096]{0}', space=vmem, size = 0x1000, scoped, tag = 'output window, operand 0, single buffered']
    %8 = vsyncpa [#allocation4], 0
    %9 = vsyncpa [#allocation7], 0
    %10 = vsyncpa [#allocation5], 0
    // Predicated region
    $region2: #{tpu_custom_call.1} parent=1 // pred_check
      _
    $region3: #{tpu_custom_call.1} parent=1 // pred_check_branch
      %12 = sbr.rel (0) target = $region5
    $region4: #{tpu_custom_call.1} parent=1 // pred_region
      %s13 = sadd.s32 0, 0
      %s14 = smul.u32 2, %s13
      %s16 = ssub.s32 256, 256
      %17 = vsyncadd [#allocation4], %s16
      %s18 = smul.addr %s14, 128
      %s19 = scalar_lea.hbm %s0, %s18
      %s20 = sshll.u32 [#allocation3], 4
      %s21 = int_to_ptr.vmem [resolvable:$true] %s20
      %26 = dma.hbm_to_vmem [thread:$0]  %s19, 256, %s21, [#allocation4], 128, 128, 8
    $region5: #{tpu_custom_call.1} parent=1 // pred_fallthru
      _
    // Predicated region
    $region6: #{tpu_custom_call.1} parent=1 // pred_check
      _
    $region7: #{tpu_custom_call.1} parent=1 // pred_check_branch
      %28 = sbr.rel (0) target = $region9
    $region8: #{tpu_custom_call.1} parent=1 // pred_region
      %s29 = sadd.s32 0, 0
      %s30 = smul.u32 2, %s29
      %s32 = ssub.s32 256, 256
      %33 = vsyncadd [#allocation7], %s32
      %s34 = smul.addr %s30, 128
      %s35 = scalar_lea.hbm %s1, %s34
      %s36 = sshll.u32 [#allocation6], 4
      %s37 = int_to_ptr.vmem [resolvable:$true] %s36
      %42 = dma.hbm_to_vmem [thread:$0]  %s35, 256, %s37, [#allocation7], 128, 128, 8
    $region9: #{tpu_custom_call.1} parent=1 // pred_fallthru
      _
    // Predicated region
    $region10: #{tpu_custom_call.1} parent=1 // pred_check
      _
    $region11: #{tpu_custom_call.1} parent=1 // pred_check_branch
      %44 = sbr.rel (0) target = $region13
    $region12: #{tpu_custom_call.1} parent=1 // pred_region
      %s45 = sadd.s32 0, 0
      %s46 = smul.u32 2, %s45
      %s48 = ssub.s32 256, 256
      %49 = vsyncadd [#allocation7], %s48
      %s50 = smul.addr %s46, 128
      %s51 = scalar_lea.hbm %s2, %s50
      %s52 = sshll.u32 [#allocation8], 4
      %s53 = int_to_ptr.vmem [resolvable:$true] %s52
      %58 = dma.hbm_to_vmem [thread:$0]  %s51, 256, %s53, [#allocation7], 128, 128, 8
    $region13: #{tpu_custom_call.1} parent=1 // pred_fallthru
      _
    // Predicated region
    $region14: #{tpu_custom_call.1} parent=1 // pred_check
      _
    $region15: #{tpu_custom_call.1} parent=1 // pred_check_branch
      %60 = sbr.rel (0) target = $region17
    $region16: #{tpu_custom_call.1} parent=1 // pred_region
      %61 = dma.done [#allocation4], 256
    $region17: #{tpu_custom_call.1} parent=1 // pred_fallthru
      _
    // Predicated region
    $region18: #{tpu_custom_call.1} parent=1 // pred_check
      _
    $region19: #{tpu_custom_call.1} parent=1 // pred_check_branch
      %63 = sbr.rel (0) target = $region21
    $region20: #{tpu_custom_call.1} parent=1 // pred_region
      %64 = dma.done [#allocation7], 256
    $region21: #{tpu_custom_call.1} parent=1 // pred_fallthru
      _
    // Predicated region
    $region22: #{tpu_custom_call.1} parent=1 // pred_check
      _
    $region23: #{tpu_custom_call.1} parent=1 // pred_check_branch
      %66 = sbr.rel (0) target = $region25
    $region24: #{tpu_custom_call.1} parent=1 // pred_region
      %67 = dma.done [#allocation7], 256
    $region25: #{tpu_custom_call.1} parent=1 // pred_fallthru
      _
    %s68 = sadd.s32 0, 0
    %s69 = smul.u32 2, %s68
    %s70 = sadd.s32 0, 0
    %s71 = smul.u32 2, %s70
    %s72 = sadd.s32 0, 0
    %s73 = smul.u32 2, %s72
    %p74 = scmp.eq.s32.totalorder 0, 0
    // Predicated region
    $region26: #{tpu_custom_call.1} parent=1 // pred_check
      %p75 = pneg %p74
    $region27: #{tpu_custom_call.1} parent=1 // pred_check_branch
      %77 = sbr.rel (%p75) target = $region29
    $region28: #{tpu_custom_call.1} parent=1 // pred_region
      %78 = vst [vmem:[#allocation2] sm:$0xff] 0.0
    $region29: #{tpu_custom_call.1} parent=1 // pred_fallthru
      _
    %v79 = vld [vmem:[#allocation3] sm:$0xff]
    %v80 = vld [vmem:[#allocation3 + $0x8] sm:$0xff]
    %v81 = vld [vmem:[#allocation6] sm:$0xff]
    %v82 = vld [vmem:[#allocation6 + $0x8] sm:$0xff]
    %v83 = vld [vmem:[#allocation8] sm:$0xff]
    %v84 = vld [vmem:[#allocation8 + $0x8] sm:$0xff]
    %v85 = vmax.f32 %v83, 0.0
    %v86 = vmax.f32 %v84, 0.0
    %v87 = vand.u32 2147483647, %v83
    %v88 = vand.u32 2147483647, %v84
    %v89 = vsub.f32 0.0, %v87
    %v90 = vsub.f32 0.0, %v88
    %v91 = vmul.f32 %v89, 1.442695
    %v92 = vpow.pop %v91
    %v93 = vmul.f32 %v90, 1.442695
    %v94 = vpow.pop %v93
    %v95 = vadd.f32 %v92, 1.0
    %v96 = vlog2.pop %v95
    %v97 = vmul.f32 %v96, 0.6931472
    %v98 = vmul.f32 -0.5, %v92
    %v99 = vadd.f32 %v98, 1.0
    %v100 = vmul.f32 %v99, %v92
    %v101 = vand.u32 2147483647, %v92
    %vm102 = vcmp.lt.f32.partialorder %v101, 0.0004427343
    %v103 = vsel %vm102, %v100, %v97
    %v104 = vadd.f32 %v94, 1.0
    %v105 = vlog2.pop %v104
    %v106 = vmul.f32 %v105, 0.6931472
    %v107 = vmul.f32 -0.5, %v94
    %v108 = vadd.f32 %v107, 1.0
    %v109 = vmul.f32 %v108, %v94
    %v110 = vand.u32 2147483647, %v94
    %vm111 = vcmp.lt.f32.partialorder %v110, 0.0004427343
    %v112 = vsel %vm111, %v109, %v106
    %v113 = vadd.f32 %v85, %v103
    %v114 = vadd.f32 %v86, %v112
    %v115 = vlog2.pop %v113
    %v116 = vmul.f32 %v115, 0.6931472
    %v117 = vlog2.pop %v114
    %v118 = vmul.f32 %v117, 0.6931472
    %v119 = vsub.f32 %v79, %v81
    %v120 = vsub.f32 %v80, %v82
    %v121 = vmul.f32 %v119, %v119
    %v122 = vmul.f32 %v120, %v120
    %v123 = vrsqrt.pop %v113
    %v124 = vrsqrt.pop %v114
    %v125 = vmul.f32 %v121, %v123
    %v126 = vmul.f32 %v122, %v124
    %v127 = vmul.f32 %v113, %v123
    %v128 = vmul.f32 %v114, %v124
    %v129 = vmul.f32 %v116, %v127
    %v130 = vmul.f32 %v118, %v128
    %v131 = vadd.f32 %v125, %v129
    %v132 = vadd.f32 %v126, %v130
    %v133 = vmul.f32 %v131, 0.5
    %v134 = vmul.f32 %v132, 0.5
    %v135 = vld [vmem:[#allocation2] sm:$0xff]
    %v136 = vadd.f32 %v133, %v134
    %v137 = vadd.f32 %v135, %v136
    %138 = vst [vmem:[#allocation2] sm:$0xff] %v137
    // Predicated region
    $region30: #{tpu_custom_call.1} parent=1 // pred_check
      %p139 = pneg %p74
    $region31: #{tpu_custom_call.1} parent=1 // pred_check_branch
      %141 = sbr.rel (%p139) target = $region33
    $region32: #{tpu_custom_call.1} parent=1 // pred_region
      %v142 = vld [vmem:[#allocation2] sm:$0xff]
      %143 = vst [vmem:[#allocation9] sm:$0xff] %v142
    $region33: #{tpu_custom_call.1} parent=1 // pred_fallthru
      _
    // Predicated region
    $region34: #{tpu_custom_call.1} parent=1 // pred_check
      _
    $region35: #{tpu_custom_call.1} parent=1 // pred_check_branch
      %145 = sbr.rel (0) target = $region37
    $region36: #{tpu_custom_call.1} parent=1 // pred_region
      %s147 = ssub.s32 128, 128
      %148 = vsyncadd [#allocation5], %s147
      %s150 = sshll.u32 [#allocation9], 4
      %s151 = int_to_ptr.vmem [resolvable:$true] %s150
      %153 = dma.vmem_to_hbm [thread:$0]  %s151, 128, %s3, [#allocation5]
    $region37: #{tpu_custom_call.1} parent=1 // pred_fallthru
      _
    // Predicated region
    $region38: #{tpu_custom_call.1} parent=1 // pred_check
      _
    $region39: #{tpu_custom_call.1} parent=1 // pred_check_branch
      %155 = sbr.rel (0) target = $region41
    $region40: #{tpu_custom_call.1} parent=1 // pred_region
      %156 = dma.done [#allocation5], 128
    $region41: #{tpu_custom_call.1} parent=1 // pred_fallthru
      _
    %157 = vsyncpa [#allocation4], 1
    %158 = vsyncpa [#allocation7], 1
    %159 = vsyncpa [#allocation5], 1

</llo_original>
